<compile_context>
chip_gen: v7x
topology: tpu7x:2x2x1
jax: 0.10.0
libtpu: 0.0.40
codegen_flags: <defaults>
</compile_context>

<pallas_src>
import functools
import math

import jax
import jax.numpy as jnp
from jax import lax
from jax.experimental import pallas as pl
from jax.experimental.pallas import tpu as pltpu


def _round_up(x, n):
    return (x + n - 1) // n * n


def _vmem_plan():
    """Generation-aware scoped-VMEM budget and row-tile cap."""
    try:
        cap = int(pltpu.get_tpu_info().vmem_capacity_bytes)
    except Exception:
        cap = 64 * 1024 * 1024
    if cap >= 100 * 1024 * 1024:          # v5e / v6e: 128 MiB physical VMEM
        return 96 * 1024 * 1024, 1024
    # v7x: 64 MiB physical VMEM (shared pressure from both TensorCores).
    return 40 * 1024 * 1024, 512


def _estimate_vmem_bytes(tb, feat_dim, c_padded, feat_itemsize, out_itemsize):
    """Honest per-step VMEM estimate:
       single-buffered resident bf16 weight
       + double-buffered feature/output tiles
       + ~6 live (TB, Cp) f32 elementwise temporaries
         (cos, sin, cos_m, e, top, sum_rest)
       + f32 feature copies used for the row normalization."""
    w_bytes = feat_dim * c_padded * 2
    in_bytes = 2 * tb * feat_dim * feat_itemsize
    out_bytes = 2 * tb * c_padded * out_itemsize
    tmp_bytes = 6 * tb * c_padded * 4 + 2 * tb * feat_dim * 4
    return w_bytes + in_bytes + out_bytes + tmp_bytes


def _choose_row_tile(b, feat_dim, c_padded, feat_itemsize, out_itemsize,
                     budget_bytes, tb_cap):
    tb = max(8, (min(tb_cap, _round_up(b, 8)) // 8) * 8)
    while tb > 8 and _estimate_vmem_bytes(
            tb, feat_dim, c_padded, feat_itemsize, out_itemsize) > budget_bytes:
        tb -= 8
    # Guarantee >= 2 grid steps when the batch allows it so the "parallel"
    # grid axis can shard batch tiles across both v7x TensorCores (neutral on
    # v5e/v6e which have a single TC).
    if b > 8:
        tb = min(tb, max(8, _round_up((b + 1) // 2, 8)))
    # Prefer a tile that divides B exactly: avoids a full jnp.pad copy of the
    # feature matrix in HBM before the kernel even starts.
    if b % 8 == 0:
        for cand in range(min(tb, b), 7, -8):
            if b % cand == 0:
                return cand
    return tb


def _make_sphereface_kernel(s, m, c_actual, c_padded):
    cos_m = math.cos(m)
    sin_m = math.sin(m)
    pad_corr = float(c_padded - c_actual)

    def kernel(feat_ref, w_ref, o_ref):
        feat = feat_ref[...].astype(jnp.float32)

        # Row-wise L2 normalize fused with the /10 scale:
        #   feat * rsqrt(sum(feat^2)) * 0.1   (rsqrt -> EUP slot, no divide,
        #   and no extra (TB,Cp)-sized multiply after the matmul)
        sumsq = jnp.sum(feat * feat, axis=1, keepdims=True)
        scale = lax.rsqrt(jnp.maximum(sumsq, 1e-24)) * 0.1
        feat_n = (feat * scale).astype(jnp.bfloat16)

        # cos_theta = (normalize(feature) @ normalize(w)) / 10
        # bf16 MXU operands, f32 accumulation.
        cos_theat = jnp.dot(feat_n, w_ref[...],
                            preferred_element_type=jnp.float32)

        # Clamp so rounding can never push 1 - cos^2 below zero.
        sin_theat = jnp.sqrt(jnp.maximum(1.0 - cos_theat * cos_theat, 0.0))
        cos_theat_m = cos_theat * cos_m - sin_theat * sin_m

        e = jnp.exp(cos_theat * s)
        # Padded weight columns are exactly zero => cos==0 => e==exp(0)==1.
        # Remove their contribution with a compile-time scalar instead of a
        # per-step iota/compare/select over the whole (TB, Cp) tile.
        sum_rest = jnp.sum(e, axis=1, keepdims=True) - e - pad_corr

        top = jnp.exp(cos_theat_m * s)
        # approx reciprocal -> EUP vrcp instead of a VPU divide chain.
        o_ref[...] = (top * pl.reciprocal(top + sum_rest, approx=True)
                      ).astype(o_ref.dtype)

    return kernel


@functools.partial(jax.jit,
                   static_argnames=("s", "m", "out_dtype", "feature_in_bf16"))
def sphereface_forward(feature, w, *, s=10.0, m=0.5,
                       out_dtype=jnp.float32, feature_in_bf16=False):
    B, F = feature.shape
    F2, C = w.shape
    assert F == F2

    # One-time (hoisted) column-wise weight normalization in the wrapper; the
    # normalized weight stays resident across grid steps (constant index_map).
    w32 = w.astype(jnp.float32)
    col_norm = jnp.sqrt(jnp.sum(w32 * w32, axis=0, keepdims=True))
    w_n = w32 / jnp.maximum(col_norm, 1e-12)

    # Lane-dense class dim: zero-pad to a multiple of 128 (unmasked vst stores);
    # the zero-padding invariant is what makes the in-kernel scalar correction
    # for padded columns exact.  Padded columns are sliced off below.
    Cp = _round_up(C, 128)
    if Cp != C:
        w_n = jnp.pad(w_n, ((0, 0), (0, Cp - C)))
    w_n = w_n.astype(jnp.bfloat16)

    feat_dtype = jnp.bfloat16 if feature_in_bf16 else jnp.float32
    feat = feature.astype(feat_dtype)

    budget, tb_cap = _vmem_plan()
    # TODO(synk): add a class-dim grid axis (two-pass / online row-sum
    # accumulation) as a fallback when the resident bf16 weight (F*Cp*2 bytes)
    # exceeds ~1/4 of the VMEM budget (earliest on v7x).
    TB = _choose_row_tile(B, F, Cp,
                          jnp.dtype(feat_dtype).itemsize,
                          jnp.dtype(out_dtype).itemsize,
                          budget, tb_cap)

    Bp = _round_up(B, TB)
    if Bp != B:
        feat = jnp.pad(feat, ((0, Bp - B), (0, 0)))

    kernel = _make_sphereface_kernel(float(s), float(m), C, Cp)
    out = pl.pallas_call(
        kernel,
        out_shape=jax.ShapeDtypeStruct((Bp, Cp), out_dtype),
        grid=(Bp // TB,),
        in_specs=[
            pl.BlockSpec((TB, F), lambda i: (i, 0)),      # batch-tiled features
            pl.BlockSpec((F, Cp), lambda i: (0, 0),       # resident normalized w
                         pipeline_mode=pl.Buffered(1)),   # constant -> 1 buffer
        ],
        out_specs=pl.BlockSpec((TB, Cp), lambda i: (i, 0)),
        compiler_params=pltpu.CompilerParams(
            dimension_semantics=("parallel",),            # megacore on v7x
            vmem_limit_bytes=budget,
        ),
    )(feat, w_n)

    return out[:B, :C]


if __name__ == "__main__":
    # Small shapes consistent with the module: batch=8, feature_num=32, class_num=16
    B, FEAT, CLS = 8, 32, 16
    key = jax.random.PRNGKey(0)
    k_feat, k_w = jax.random.split(key)

    feature = jax.random.normal(k_feat, (B, FEAT), dtype=jnp.float32)
    # nn.Parameter(torch.rand(feature_num, class_num)) -> uniform [0, 1)
    w = jax.random.uniform(k_w, (FEAT, CLS), dtype=jnp.float32)

    out = sphereface_forward(feature, w, s=10.0, m=0.5)
    jax.block_until_ready(out)

    # Pure-JAX f32 reference for sanity.
    f_n = feature / jnp.maximum(
        jnp.linalg.norm(feature, axis=1, keepdims=True), 1e-12)
    w_ref = w / jnp.maximum(jnp.linalg.norm(w, axis=0, keepdims=True), 1e-12)
    cos = (f_n @ w_ref) / 10.0
    sin = jnp.sqrt(1.0 - cos * cos)
    cos_m_ref = cos * math.cos(0.5) - sin * math.sin(0.5)
    e = jnp.exp(cos * 10.0)
    sum_e = jnp.sum(e, axis=1, keepdims=True) - e
    top = jnp.exp(cos_m_ref * 10.0)
    ref = top / (top + sum_e)

    assert out.shape == (B, CLS)
    # bf16 MXU operands + approx reciprocal => slightly looser tolerance.
    assert jnp.allclose(out, ref, rtol=2e-2, atol=1e-3), float(
        jnp.max(jnp.abs(out - ref)))
    print("KERNEL_OK")
</pallas_src>

<mosaic_0001>
module attributes {stable_mosaic.version = 11 : i64} {
  func.func @kernel(%arg0: i32, %arg1: memref<8x32xf32, #tpu.memory_space<vmem>>, %arg2: memref<32x128xbf16, #tpu.memory_space<vmem>>, %arg3: memref<8x128xf32, #tpu.memory_space<vmem>>) attributes {dimension_semantics = [#tpu.dimension_semantics<parallel>], iteration_bounds = array<i64: 1>, scalar_prefetch = 0 : i64, scratch_operands = 0 : i64, tpu.core_type = #tpu.core_type<tc>, window_params = [{transform_indices = @transform_0, window_bounds = array<i64: 8, 32>}, {pipeline_mode = #tpu.pipeline_mode<synchronous>, transform_indices = @transform_1, window_bounds = array<i64: 32, 128>}, {transform_indices = @transform_2, window_bounds = array<i64: 8, 128>}]} {
    %c0 = arith.constant 0 : index
    %c0_0 = arith.constant 0 : index
    %0 = vector.load %arg1[%c0, %c0_0] : memref<8x32xf32, #tpu.memory_space<vmem>>, vector<8x32xf32>
    %1 = arith.mulf %0, %0 : vector<8x32xf32>
    %cst = arith.constant dense<0.000000e+00> : vector<8xf32>
    %2 = vector.multi_reduction <add>, %1, %cst [1] : vector<8x32xf32> to vector<8xf32>
    %3 = vector.shape_cast %2 : vector<8xf32> to vector<8x1xf32>
    %cst_1 = arith.constant 1.000000e-24 : f32
    %4 = vector.broadcast %cst_1 : f32 to vector<8x1xf32>
    %5 = arith.maximumf %3, %4 : vector<8x1xf32>
    %6 = math.rsqrt %5 : vector<8x1xf32>
    %cst_2 = arith.constant 1.000000e-01 : f32
    %7 = vector.broadcast %cst_2 : f32 to vector<8x1xf32>
    %8 = arith.mulf %6, %7 : vector<8x1xf32>
    %9 = vector.broadcast %8 : vector<8x1xf32> to vector<8x32xf32>
    %10 = arith.mulf %0, %9 : vector<8x32xf32>
    %11 = arith.truncf %10 : vector<8x32xf32> to vector<8x32xbf16>
    %c0_3 = arith.constant 0 : index
    %c0_4 = arith.constant 0 : index
    %12 = vector.load %arg2[%c0_3, %c0_4] : memref<32x128xbf16, #tpu.memory_space<vmem>>, vector<32x128xbf16>
    %cst_5 = arith.constant dense<0.000000e+00> : vector<8x128xf32>
    %13 = tpu.matmul %11, %12, %cst_5 {dimension_numbers = #tpu.dot_dimension_numbers<[1], [0], [0], [1], [0, 0, 1, 1], [], []>} : vector<8x32xbf16>, vector<32x128xbf16>, vector<8x128xf32> -> vector<8x128xf32>
    %14 = arith.mulf %13, %13 : vector<8x128xf32>
    %cst_6 = arith.constant 1.000000e+00 : f32
    %15 = vector.broadcast %cst_6 : f32 to vector<8x128xf32>
    %16 = arith.subf %15, %14 : vector<8x128xf32>
    %cst_7 = arith.constant 0.000000e+00 : f32
    %17 = vector.broadcast %cst_7 : f32 to vector<8x128xf32>
    %18 = arith.maximumf %16, %17 : vector<8x128xf32>
    %19 = math.sqrt %18 : vector<8x128xf32>
    %cst_8 = arith.constant 0.87758255 : f32
    %20 = vector.broadcast %cst_8 : f32 to vector<8x128xf32>
    %21 = arith.mulf %13, %20 : vector<8x128xf32>
    %cst_9 = arith.constant 0.47942555 : f32
    %22 = vector.broadcast %cst_9 : f32 to vector<8x128xf32>
    %23 = arith.mulf %19, %22 : vector<8x128xf32>
    %24 = arith.subf %21, %23 : vector<8x128xf32>
    %cst_10 = arith.constant 1.000000e+01 : f32
    %25 = vector.broadcast %cst_10 : f32 to vector<8x128xf32>
    %26 = arith.mulf %13, %25 : vector<8x128xf32>
    %27 = math.exp %26 : vector<8x128xf32>
    %cst_11 = arith.constant dense<0.000000e+00> : vector<8xf32>
    %28 = vector.multi_reduction <add>, %27, %cst_11 [1] : vector<8x128xf32> to vector<8xf32>
    %29 = vector.shape_cast %28 : vector<8xf32> to vector<8x1xf32>
    %30 = vector.broadcast %29 : vector<8x1xf32> to vector<8x128xf32>
    %31 = arith.subf %30, %27 : vector<8x128xf32>
    %cst_12 = arith.constant 1.120000e+02 : f32
    %32 = vector.broadcast %cst_12 : f32 to vector<8x128xf32>
    %33 = arith.subf %31, %32 : vector<8x128xf32>
    %cst_13 = arith.constant 1.000000e+01 : f32
    %34 = vector.broadcast %cst_13 : f32 to vector<8x128xf32>
    %35 = arith.mulf %24, %34 : vector<8x128xf32>
    %36 = math.exp %35 : vector<8x128xf32>
    %37 = arith.addf %36, %33 : vector<8x128xf32>
    %38 = tpu.reciprocal %37 {approx = true} : vector<8x128xf32> -> vector<8x128xf32>
    %39 = arith.mulf %36, %38 : vector<8x128xf32>
    %c0_14 = arith.constant 0 : index
    %c0_15 = arith.constant 0 : index
    %40 = vector.load %arg3[%c0_14, %c0_15] : memref<8x128xf32, #tpu.memory_space<vmem>>, vector<8x128xf32>
    tpu.vector_store %arg3[%c0_14, %c0_15], %39 {strides = array<i32>} : memref<8x128xf32, #tpu.memory_space<vmem>>, vector<8x128xf32>,
    return
  }
  func.func @transform_0(%arg0: i32) -> (i32, i32) {
    %c0_i32 = arith.constant 0 : i32
    %c0_i32_0 = arith.constant 0 : i32
    return %arg0, %c0_i32 : i32, i32
  }
  func.func @transform_1(%arg0: i32) -> (i32, i32) {
    %c0_i32 = arith.constant 0 : i32
    %c0_i32_0 = arith.constant 0 : i32
    %c0_i32_1 = arith.constant 0 : i32
    return %c0_i32, %c0_i32_0 : i32, i32
  }
  func.func @transform_2(%arg0: i32) -> (i32, i32) {
    %c0_i32 = arith.constant 0 : i32
    %c0_i32_0 = arith.constant 0 : i32
    return %arg0, %c0_i32 : i32, i32
  }
}

</mosaic_0001>

<llo_original>
// kernel: sphereface_forward.1
$region0: #{sphereface_forward.1}
  #allocation0 [shape = 'u32[]', space=smem, size = 0x4, offset = 0x4, fixed_abs, tag = 'smem constant byte address 0x4 - core index']
  #allocation1 [shape = 'u32[144,128]{1,0:T(1,128)}', space=vmem, size = 0x12000, scoped, tag = 'internal scratch']
  %s0 = inlined_call_operand.vmem [shape: f32[8,32], index: 0, kind: input, shape index: {}]
  %s1 = inlined_call_operand.vmem [shape: bf16[32,128], index: 1, kind: input, shape index: {}]
  %s2 = inlined_call_operand.hbm [shape: f32[8,128], index: 2, kind: output, shape index: {}]
  %s3 = sld [smem:[#allocation0]]
  $region18: #{sphereface_forward.1} parent=0
    _
  %s5 = ssub.s32 1, %s3
  %s6 = scalar_select 0, %s5, %s3
  $region1: #{sphereface_forward.1} parent=0
    #allocation2 [shape = 'u8[4096]{0}', space=vmem, size = 0x1000, scoped, tag = 'output window, operand 0, single buffered']
    #allocation3 [shape = 's32[1]{0}', space=sflag, size = 0x4, scoped, tag = 'scoped memory for sphereface_forward.1']
    %7 = vsyncpa [#allocation3], 0
    // Predicated region
    $region2: #{sphereface_forward.1} parent=1 // pred_check
      _
    $region3: #{sphereface_forward.1} parent=1 // pred_check_branch
      %9 = sbr.rel (0) target = $region5
    $region4: #{sphereface_forward.1} parent=1 // pred_region
      _
    $region5: #{sphereface_forward.1} parent=1 // pred_fallthru
      _
    // Predicated region
    $region6: #{sphereface_forward.1} parent=1 // pred_check
      _
    $region7: #{sphereface_forward.1} parent=1 // pred_check_branch
      %11 = sbr.rel (0) target = $region9
    $region8: #{sphereface_forward.1} parent=1 // pred_region
      _
    $region9: #{sphereface_forward.1} parent=1 // pred_fallthru
      _
    %v13 = vld [vmem:[%s0] sm:$0xff]
    %v14 = vmul.f32 %v13, %v13
    %vm15 = vcmask 261120
    %v16 = vsel %vm15, %v14, 0.0
    %17 = vadd.xlane.f32.xlu0 %v16
    %v18 = vpop.xlane.xlu0 %17
    %v19 = vmax.f32 %v18, 1e-24
    %v20 = vrsqrt.pop %v19
    %v21 = vmul.f32 %v20, 0.1
    %v22 = vmul.f32 %v13, %v21
    %v23 = vpack.c.bf16 %v22, %v22
    %v24 = vld [vmem:[%s1] sm:$0xf]
    %v25 = vld [vmem:[%s1 + $0x4] sm:$0xf]
    %v26 = vld [vmem:[%s1 + $0x8] sm:$0xf]
    %v27 = vld [vmem:[%s1 + $0xc] sm:$0xf]
    %v32 = vunpack.c.l.b16 %v24
    %v33 = vunpack.c.l.b16 %v25
    %v34 = vunpack.c.l.b16 %v26
    %v35 = vunpack.c.l.b16 %v27
    %v36 = vpack.c.b16 %v33, %v32
    %v37 = vpack.c.b16 %v35, %v34
    %v41 = vsel %vm15, %v23, 0
    %43 = vmatprep.subr.bf16.mxu0 0
    %44 = vmatpush1.bf16.msra.mxu0 %v36
    %45 = vmatprep.subr.bf16.mxu0 0
    %46 = vmatpush1.bf16.msra.mxu0 %v37
    %47 = vmatprep.subr.bf16.mxu0 0
    %48 = vmatpush1.bf16.msra.mxu0 0
    %49 = vmatprep.subr.bf16.mxu0 0
    %50 = vmatpush1.bf16.msra.mxu0 0
    %51 = vmatprep.subr.bf16.mxu0 0
    %52 = vmatpush1.bf16.msra.mxu0 0
    %53 = vmatprep.subr.bf16.mxu0 0
    %54 = vmatpush1.bf16.msra.mxu0 0
    %55 = vmatprep.subr.bf16.mxu0 0
    %56 = vmatpush1.bf16.msra.mxu0 0
    %57 = vmatprep.subr.bf16.mxu0 0
    %58 = vmatpush1.bf16.msra.mxu0 0
    %59 = vmatprep.subr.bf16.mxu0 0
    %60 = vmatpush1.bf16.msra.mxu0 0
    %61 = vmatprep.subr.bf16.mxu0 0
    %62 = vmatpush1.bf16.msra.mxu0 0
    %63 = vmatprep.subr.bf16.mxu0 0
    %64 = vmatpush1.bf16.msra.mxu0 0
    %65 = vmatprep.subr.bf16.mxu0 0
    %66 = vmatpush1.bf16.msra.mxu0 0
    %67 = vmatprep.subr.bf16.mxu0 0
    %68 = vmatpush1.bf16.msra.mxu0 0
    %69 = vmatprep.subr.bf16.mxu0 0
    %70 = vmatpush1.bf16.msra.mxu0 0
    %71 = vmatprep.subr.bf16.mxu0 0
    %72 = vmatpush1.bf16.msra.mxu0 0
    %73 = vmatprep.subr.bf16.mxu0 0
    %74 = vmatpush1.bf16.msra.mxu0 0
    %75 = vmatprep.mubr.bf16.mxu0 0
    %76 = vmatmul.mubr.bf16.gmra.mrb[0].mxu0 %v41
    %v77 = vpop.f32.mrb[0].mxu0
    %v78 = vadd.f32 0.0, %v77
    %v79 = vpop.f32.mrb[0].mxu0
    %v80 = vpop.f32.mrb[0].mxu0
    %v81 = vpop.f32.mrb[0].mxu0
    %82 = vdwg.mxu0
    %v83 = vmul.f32 %v78, %v78
    %v84 = vsub.f32 1.0, %v83
    %v85 = vmax.f32 %v84, 0.0
    %v86 = vrsqrt.pop %v85
    %v87 = vmul.f32 %v85, %v86
    %vm88 = vcmp.eq.f32.partialorder %v85, inf
    %v89 = vsel %vm88, %v85, %v87
    %vm90 = vcmp.eq.f32.partialorder %v85, 0.0
    %v91 = vand.u32 %v85, 2147483648
    %v92 = vsel %vm90, %v91, %v89
    %v93 = vmul.f32 %v78, 0.87758255
    %v94 = vmul.f32 %v92, 0.47942555
    %v95 = vsub.f32 %v93, %v94
    %v96 = vmul.f32 %v78, 10.0
    %v97 = vmul.f32 %v96, 1.442695
    %v98 = vpow.pop %v97
    %99 = vadd.xlane.f32.xlu0 %v98
    %v100 = vpop.xlane.xlu0 %99
    %v101 = vsub.f32 %v100, %v98
    %v102 = vsub.f32 %v101, 112.0
    %v103 = vmul.f32 %v95, 10.0
    %v104 = vmul.f32 %v103, 1.442695
    %v105 = vpow.pop %v104
    %v106 = vadd.f32 %v105, %v102
    %v107 = vrcp.pop %v106
    %v108 = vmul.f32 %v105, %v107
    %109 = vst [vmem:[#allocation2] sm:$0xff] %v108
    // Predicated region
    $region10: #{sphereface_forward.1} parent=1 // pred_check
      _
    $region11: #{sphereface_forward.1} parent=1 // pred_check_branch
      %111 = sbr.rel (0) target = $region13
    $region12: #{sphereface_forward.1} parent=1 // pred_region
      %s113 = ssub.s32 128, 128
      %114 = vsyncadd [#allocation3], %s113
      %s116 = sshll.u32 [#allocation2], 4
      %s117 = int_to_ptr.vmem [resolvable:$true] %s116
      %119 = dma.vmem_to_hbm [thread:$0]  %s117, 128, %s2, [#allocation3]
    $region13: #{sphereface_forward.1} parent=1 // pred_fallthru
      _
    // Predicated region
    $region14: #{sphereface_forward.1} parent=1 // pred_check
      _
    $region15: #{sphereface_forward.1} parent=1 // pred_check_branch
      %121 = sbr.rel (0) target = $region17
    $region16: #{sphereface_forward.1} parent=1 // pred_region
      %122 = dma.done [#allocation3], 128
    $region17: #{sphereface_forward.1} parent=1 // pred_fallthru
      _
    %123 = vsyncpa [#allocation3], 1

</llo_original>
